<compile_context>
chip_gen: v5e
topology: v5e:2x2
jax: 0.10.0
libtpu: 0.0.40
codegen_flags: <defaults>
</compile_context>

<pallas_src>
import functools

import numpy as np
import jax
import jax.numpy as jnp
from jax.experimental import pallas as pl
from jax.experimental.pallas import tpu as pltpu

# ---- model hyperparameters (small, synthetic) -------------------------------
EMBED_SIZE = 32
KERNEL_SIZES = (3, 4, 5)
NUM_CHANNELS = (8, 8, 8)          # sum = 24 -> classifier in-features
BATCH = 2
SEQ_LEN = 16

KMAX = max(KERNEL_SIZES)
SUM_C = sum(NUM_CHANNELS)


def cnn_tag_kernel(xs_ref, wconv_ref, p_ref, out_ref, *, batch, seq_len):
    """Single-invocation kernel.

    xs_ref:    (batch*seq_len, KMAX*E) bf16  im2col slab (window taus lane-concat)
    wconv_ref: (KMAX*E, SUM_C)         bf16  conv weights, tau-zero-padded + concat
    p_ref:     (8, 128)                f32   packed small operands:
                 row 0: conv bias (lanes 0..SUM_C-1)
                 row 1: folded classifier->dense->final weight row
                 row 2: folded bias at lane 0
                 row 3: per-channel window-start validity threshold (seq_len - k)
    out_ref:   (batch, 1)              f32
    """
    r_win = batch * seq_len

    pp = p_ref[...]                        # (8, 128) f32, single vreg
    b_conv = pp[0:1, :SUM_C]               # (1, SUM_C)
    w_fc = pp[1:2, :SUM_C]                 # (1, SUM_C)
    b_fc = pp[2:3, 0:1]                    # (1, 1)
    thr = pp[3:4, :SUM_C]                  # (1, SUM_C)

    # Every Conv1d (all kernel sizes, all channels) as ONE bf16 MXU matmul,
    # accumulated in f32.  All subsequent elementwise math stays f32.
    y = jnp.dot(xs_ref[...], wconv_ref[...], preferred_element_type=jnp.float32)
    y = jnp.maximum(y + b_conv, 0.0)       # bias + ReLU on the SUM_C-wide slab

    # Rebuild the window-validity mask in-kernel (no HBM mask DMA):
    # window start t (= row % seq_len) is valid for a channel iff t <= seq_len-k.
    # Zeroing invalid positions is safe before the max pool since ReLU >= 0.
    t = jax.lax.broadcasted_iota(jnp.int32, (r_win, SUM_C), 0) % seq_len
    y = jnp.where(t.astype(jnp.float32) <= thr, y, 0.0)

    # Global max pool over time, per example: one XLU reduction.
    enc = jnp.max(y.reshape(batch, seq_len, SUM_C), axis=1)   # (batch, SUM_C)

    # Folded classifier -> dense -> final (all affine; dropout identity at eval):
    # one VPU multiply + lane reduction instead of three tiny MXU matmuls.
    # TODO(synk): training-mode dropout would need pltpu.prng_random_bits masking
    # and would invalidate this affine fold.
    out = jnp.sum(enc * w_fc, axis=-1, keepdims=True) + b_fc  # (batch, 1)
    out_ref[...] = out.astype(out_ref.dtype)


def prepare_params(params, seq_len):
    """One-time fold of module parameters into the kernel's fused layout.

    Runs in NumPy OUTSIDE the jitted per-call path (depends only on parameters
    and static shapes); in deployment this is computed exactly once.
    Returns (w_conv_bf16 (KMAX*E, SUM_C), packed_slab_f32 (8, 128)).
    """
    blocks, biases = [], []
    for (w, b), k in zip(params["convs"], KERNEL_SIZES):
        w_np = np.asarray(w, np.float32)                       # (k, E, C)
        w_pad = np.zeros((KMAX, EMBED_SIZE, w_np.shape[-1]), np.float32)
        w_pad[:k] = w_np                                       # zero-pad taus to KMAX
        blocks.append(w_pad.reshape(KMAX * EMBED_SIZE, w_np.shape[-1]))
        biases.append(np.asarray(b, np.float32))
    w_conv = np.concatenate(blocks, axis=1)                    # (KMAX*E, SUM_C)
    b_conv = np.concatenate(biases, axis=1)                    # (1, SUM_C)

    cls_w = np.asarray(params["cls_w"], np.float32)
    cls_b = np.asarray(params["cls_b"], np.float32)
    dense_w = np.asarray(params["dense_w"], np.float32)
    dense_b = np.asarray(params["dense_b"], np.float32)
    final_w = np.asarray(params["final_w"], np.float32)
    final_b = np.asarray(params["final_b"], np.float32)
    # classifier -> dense -> final are purely affine at eval time: fold them.
    w_fc = cls_w @ dense_w @ final_w                           # (SUM_C, 1)
    b_fc = cls_b @ dense_w @ final_w + dense_b @ final_w + final_b  # (1, 1)

    # per-channel validity threshold for window starts: t valid iff t <= L - k
    thr = np.concatenate([np.full((c,), seq_len - k, np.float32)
                          for c, k in zip(NUM_CHANNELS, KERNEL_SIZES)])

    # pack every small operand into one (8, 128)-padded f32 slab -> single DMA
    slab = np.zeros((8, 128), np.float32)
    slab[0, :SUM_C] = b_conv.reshape(-1)
    slab[1, :SUM_C] = w_fc.reshape(-1)
    slab[2, 0] = float(b_fc.reshape(-1)[0])
    slab[3, :SUM_C] = thr

    return jnp.asarray(w_conv, jnp.bfloat16), jnp.asarray(slab, jnp.float32)


@jax.jit
def cnn_tag_forward(x, w_conv, p_slab):
    b, l, e = x.shape
    # Per-call data prep (must be per-call; fuses into one small XLA fusion):
    # build the im2col slab with aligned, lane-dense layout OUTSIDE the kernel
    # so the kernel avoids unaligned sublane slices.  Cross-batch / padded rows
    # are harmless: they hit zero-padded weight taus or masked window starts.
    x2 = jnp.pad(x.reshape(b * l, e), ((0, KMAX - 1), (0, 0)))
    xs = jnp.concatenate([x2[tau:tau + b * l, :] for tau in range(KMAX)],
                         axis=-1).astype(jnp.bfloat16)          # (b*l, KMAX*E)

    flops = 2 * (b * l) * (KMAX * e) * SUM_C + 6 * (b * l) * SUM_C + 2 * b * SUM_C
    bytes_accessed = xs.size * 2 + w_conv.size * 2 + p_slab.size * 4 + b * 4

    kernel = functools.partial(cnn_tag_kernel, batch=b, seq_len=l)
    return pl.pallas_call(
        kernel,
        out_shape=jax.ShapeDtypeStruct((b, 1), jnp.float32),
        in_specs=[pl.BlockSpec(memory_space=pltpu.MemorySpace.VMEM)] * 3,
        out_specs=pl.BlockSpec(memory_space=pltpu.MemorySpace.VMEM),
        cost_estimate=pl.CostEstimate(flops=flops, transcendentals=0,
                                      bytes_accessed=bytes_accessed),
    )(xs, w_conv, p_slab)


def init_params(key):
    """Deterministic synthetic parameters (shapes follow CNNTag.__init__)."""
    params = {"convs": []}
    keys = jax.random.split(key, 2 * len(KERNEL_SIZES) + 6)
    ki = 0
    for c, k in zip(NUM_CHANNELS, KERNEL_SIZES):
        # PyTorch Conv1d weight is (C, E, k); we store the transposed (k, E, C).
        w = jax.random.normal(keys[ki], (k, EMBED_SIZE, c), jnp.float32) * 0.1
        b = jax.random.normal(keys[ki + 1], (1, c), jnp.float32) * 0.1
        params["convs"].append((w, b))
        ki += 2
    params["cls_w"] = jax.random.normal(keys[ki + 0], (SUM_C, 64), jnp.float32) * 0.1
    params["cls_b"] = jax.random.normal(keys[ki + 1], (1, 64), jnp.float32) * 0.1
    params["dense_w"] = jax.random.normal(keys[ki + 2], (64, 32), jnp.float32) * 0.1
    params["dense_b"] = jax.random.normal(keys[ki + 3], (1, 32), jnp.float32) * 0.1
    params["final_w"] = jax.random.normal(keys[ki + 4], (32, 1), jnp.float32) * 0.1
    params["final_b"] = jax.random.normal(keys[ki + 5], (1, 1), jnp.float32) * 0.1
    return params


def reference_forward(x, params):
    """Pure-JAX reference of CNNTag.forward in eval mode (unfused, high precision)."""
    hp = jax.lax.Precision.HIGHEST
    feats = []
    for (w, b), k in zip(params["convs"], KERNEL_SIZES):
        l_out = x.shape[1] - k + 1
        acc = jnp.zeros((x.shape[0], l_out, w.shape[-1]), jnp.float32)
        for tau in range(k):
            acc = acc + jnp.einsum("ble,ec->blc", x[:, tau:tau + l_out, :], w[tau],
                                   precision=hp)
        acc = jax.nn.relu(acc + b[None])
        feats.append(acc.max(axis=1))
    enc = jnp.concatenate(feats, axis=1)
    h = jnp.dot(enc, params["cls_w"], precision=hp) + params["cls_b"]
    h = jnp.dot(h, params["dense_w"], precision=hp) + params["dense_b"]
    return jnp.dot(h, params["final_w"], precision=hp) + params["final_b"]


if __name__ == "__main__":
    key = jax.random.PRNGKey(0)
    k_x, k_p = jax.random.split(key)

    # inputs: (batch, seq_len, embed_size), matching CNNTag.forward's `inputs`
    x = jax.random.normal(k_x, (BATCH, SEQ_LEN, EMBED_SIZE), jnp.float32)
    params = init_params(k_p)

    # one-time parameter fold / packing (outside the per-call jit path)
    w_conv, p_slab = prepare_params(params, SEQ_LEN)

    out = cnn_tag_forward(x, w_conv, p_slab)
    out = jax.block_until_ready(out)

    ref = reference_forward(x, params)
    assert out.shape == (BATCH, 1)
    # bf16 MXU operands (f32 accumulation) vs f32 reference -> loosened tolerance.
    assert jnp.allclose(out, ref, atol=2e-2, rtol=2e-2), (out, ref)

    print("KERNEL_OK")
</pallas_src>

<mosaic_0001>
module attributes {stable_mosaic.version = 11 : i64} {
  func.func @cnn_tag_kernel(%arg0: memref<32x160xbf16, #tpu.memory_space<vmem>>, %arg1: memref<160x24xbf16, #tpu.memory_space<vmem>>, %arg2: memref<8x128xf32, #tpu.memory_space<vmem>>, %arg3: memref<2x1xf32, #tpu.memory_space<vmem>>) attributes {dimension_semantics = [], scalar_prefetch = 0 : i64, scratch_operands = 0 : i64, tpu.core_type = #tpu.core_type<tc>} {
    %c0 = arith.constant 0 : index
    %c0_0 = arith.constant 0 : index
    %0 = vector.load %arg2[%c0, %c0_0] : memref<8x128xf32, #tpu.memory_space<vmem>>, vector<8x128xf32>
    %1 = vector.extract_strided_slice %0 {offsets = [0, 0], sizes = [1, 24], strides = [1, 1]} : vector<8x128xf32> to vector<1x24xf32>
    %2 = vector.extract_strided_slice %0 {offsets = [1, 0], sizes = [1, 24], strides = [1, 1]} : vector<8x128xf32> to vector<1x24xf32>
    %3 = vector.extract_strided_slice %0 {offsets = [2, 0], sizes = [1, 1], strides = [1, 1]} : vector<8x128xf32> to vector<1x1xf32>
    %4 = vector.extract_strided_slice %0 {offsets = [3, 0], sizes = [1, 24], strides = [1, 1]} : vector<8x128xf32> to vector<1x24xf32>
    %c0_1 = arith.constant 0 : index
    %c0_2 = arith.constant 0 : index
    %5 = vector.load %arg0[%c0_1, %c0_2] : memref<32x160xbf16, #tpu.memory_space<vmem>>, vector<32x160xbf16>
    %c0_3 = arith.constant 0 : index
    %c0_4 = arith.constant 0 : index
    %6 = vector.load %arg1[%c0_3, %c0_4] : memref<160x24xbf16, #tpu.memory_space<vmem>>, vector<160x24xbf16>
    %cst = arith.constant dense<0.000000e+00> : vector<32x24xf32>
    %7 = tpu.matmul %5, %6, %cst {dimension_numbers = #tpu.dot_dimension_numbers<[1], [0], [0], [1], [0, 0, 1, 1], [], []>} : vector<32x160xbf16>, vector<160x24xbf16>, vector<32x24xf32> -> vector<32x24xf32>
    %8 = vector.broadcast %1 : vector<1x24xf32> to vector<32x24xf32>
    %9 = arith.addf %7, %8 : vector<32x24xf32>
    %cst_5 = arith.constant 0.000000e+00 : f32
    %10 = vector.broadcast %cst_5 : f32 to vector<32x24xf32>
    %11 = arith.maximumf %9, %10 : vector<32x24xf32>
    %12 = tpu.iota {dimensions = array<i32: 0>} : vector<32x24xi32>
    %c16_i32 = arith.constant 16 : i32
    %c0_i32 = arith.constant 0 : i32
    %13 = arith.cmpi eq, %c16_i32, %c0_i32 : i32
    %c1_i32 = arith.constant 1 : i32
    %14 = arith.select %13, %c1_i32, %c16_i32 : i32
    %15 = vector.broadcast %14 : i32 to vector<32x24xi32>
    %16 = arith.remsi %12, %15 : vector<32x24xi32>
    %c0_i32_6 = arith.constant 0 : i32
    %17 = vector.broadcast %c0_i32_6 : i32 to vector<32x24xi32>
    %18 = arith.cmpi ne, %16, %17 : vector<32x24xi32>
    %c0_i32_7 = arith.constant 0 : i32
    %19 = vector.broadcast %c0_i32_7 : i32 to vector<32x24xi32>
    %20 = arith.cmpi slt, %16, %19 : vector<32x24xi32>
    %c0_i32_8 = arith.constant 0 : i32
    %21 = arith.cmpi slt, %14, %c0_i32_8 : i32
    %22 = vector.broadcast %21 : i1 to vector<32x24xi1>
    %23 = vector.broadcast %22 : vector<32x24xi1> to vector<32x24xi1>
    %24 = arith.xori %20, %23 : vector<32x24xi1>
    %25 = arith.andi %24, %18 : vector<32x24xi1>
    %26 = vector.broadcast %14 : i32 to vector<32x24xi32>
    %27 = arith.addi %16, %26 : vector<32x24xi32>
    %28 = arith.select %25, %27, %16 : vector<32x24xi1>, vector<32x24xi32>
    %29 = arith.sitofp %28 : vector<32x24xi32> to vector<32x24xf32>
    %30 = vector.broadcast %4 : vector<1x24xf32> to vector<32x24xf32>
    %31 = arith.cmpf ole, %29, %30 : vector<32x24xf32>
    %cst_9 = arith.constant 0.000000e+00 : f32
    %32 = vector.broadcast %cst_9 : f32 to vector<32x24xf32>
    %33 = arith.select %31, %11, %32 : vector<32x24xi1>, vector<32x24xf32>
    %34 = vector.shape_cast %33 : vector<32x24xf32> to vector<2x16x24xf32>
    %cst_10 = arith.constant dense<0xFF800000> : vector<2x24xf32>
    %35 = vector.multi_reduction <maximumf>, %34, %cst_10 [1] : vector<2x16x24xf32> to vector<2x24xf32>
    %36 = vector.broadcast %2 : vector<1x24xf32> to vector<2x24xf32>
    %37 = arith.mulf %35, %36 : vector<2x24xf32>
    %cst_11 = arith.constant dense<0.000000e+00> : vector<2xf32>
    %38 = vector.multi_reduction <add>, %37, %cst_11 [1] : vector<2x24xf32> to vector<2xf32>
    %39 = vector.shape_cast %38 : vector<2xf32> to vector<2x1xf32>
    %40 = vector.broadcast %3 : vector<1x1xf32> to vector<2x1xf32>
    %41 = arith.addf %39, %40 : vector<2x1xf32>
    %c0_12 = arith.constant 0 : index
    %c0_13 = arith.constant 0 : index
    %42 = vector.load %arg3[%c0_12, %c0_13] : memref<2x1xf32, #tpu.memory_space<vmem>>, vector<2x1xf32>
    tpu.vector_store %arg3[%c0_12, %c0_13], %41 {strides = array<i32>} : memref<2x1xf32, #tpu.memory_space<vmem>>, vector<2x1xf32>,
    return
  }
}

</mosaic_0001>

<llo_original>
// kernel: cnn_tag_forward.1
$region0: #{cnn_tag_forward.1}
  #allocation0 [shape = 'u32[]', space=smem, size = 0x4, offset = 0x4, fixed_abs, tag = 'smem constant byte address 0x4 - core index']
  #allocation1 [shape = 'u32[72,128]{1,0:T(1,128)}', space=vmem, size = 0x9000, scoped, tag = 'internal scratch']
  %s0 = inlined_call_operand.vmem [shape: bf16[32,160], index: 0, kind: input, shape index: {}]
  %s1 = inlined_call_operand.vmem [shape: bf16[160,24], index: 1, kind: input, shape index: {}]
  %s2 = inlined_call_operand.vmem [shape: f32[8,128], index: 2, kind: input, shape index: {}]
  %s3 = inlined_call_operand.vmem [shape: f32[2,1], index: 3, kind: output, shape index: {}]
  %s4 = sld [smem:[#allocation0]]
  $region22: #{cnn_tag_forward.1} parent=0
    _
  %s6 = ssub.s32 1, %s4
  %s7 = scalar_select 0, %s6, %s4
  // Predicated region
  $region2: #{cnn_tag_forward.1} parent=0 // pred_check
    _
  $region3: #{cnn_tag_forward.1} parent=0 // pred_check_branch
    %9 = sbr.rel (0) target = $region5
  $region4: #{cnn_tag_forward.1} parent=0 // pred_region
    _
  $region5: #{cnn_tag_forward.1} parent=0 // pred_fallthru
    _
  // Predicated region
  $region6: #{cnn_tag_forward.1} parent=0 // pred_check
    _
  $region7: #{cnn_tag_forward.1} parent=0 // pred_check_branch
    %11 = sbr.rel (0) target = $region9
  $region8: #{cnn_tag_forward.1} parent=0 // pred_region
    _
  $region9: #{cnn_tag_forward.1} parent=0 // pred_fallthru
    _
  // Predicated region
  $region10: #{cnn_tag_forward.1} parent=0 // pred_check
    _
  $region11: #{cnn_tag_forward.1} parent=0 // pred_check_branch
    %13 = sbr.rel (0) target = $region13
  $region12: #{cnn_tag_forward.1} parent=0 // pred_region
    _
  $region13: #{cnn_tag_forward.1} parent=0 // pred_fallthru
    _
  %v15 = vld [vmem:[%s2] sm:$0xff]
  %v16 = vld [vmem:[%s0] sm:$0xff]
  %v17 = vld [vmem:[%s0 + $0x8] sm:$0xff]
  %v18 = vld [vmem:[%s0 + $0x10] sm:$0xff]
  %v19 = vld [vmem:[%s0 + $0x18] sm:$0xff]
  %v20 = vld [vmem:[%s1] sm:$0xf]
  %v21 = vld [vmem:[%s1 + $0x4] sm:$0xf]
  %v22 = vld [vmem:[%s1 + $0x8] sm:$0xf]
  %v23 = vld [vmem:[%s1 + $0xc] sm:$0xf]
  %v24 = vld [vmem:[%s1 + $0x10] sm:$0xf]
  %v25 = vld [vmem:[%s1 + $0x14] sm:$0xf]
  %v26 = vld [vmem:[%s1 + $0x18] sm:$0xf]
  %v27 = vld [vmem:[%s1 + $0x1c] sm:$0xf]
  %v28 = vld [vmem:[%s1 + $0x20] sm:$0xf]
  %v29 = vld [vmem:[%s1 + $0x24] sm:$0xf]
  %v30 = vld [vmem:[%s1 + $0x28] sm:$0xf]
  %v31 = vld [vmem:[%s1 + $0x2c] sm:$0xf]
  %v32 = vld [vmem:[%s1 + $0x30] sm:$0xf]
  %v33 = vld [vmem:[%s1 + $0x34] sm:$0xf]
  %v34 = vld [vmem:[%s1 + $0x38] sm:$0xf]
  %v35 = vld [vmem:[%s1 + $0x3c] sm:$0xf]
  %v36 = vld [vmem:[%s1 + $0x40] sm:$0xf]
  %v37 = vld [vmem:[%s1 + $0x44] sm:$0xf]
  %v38 = vld [vmem:[%s1 + $0x48] sm:$0xf]
  %v39 = vld [vmem:[%s1 + $0x4c] sm:$0xf]
  %v40 = vperm.slane %v15, 0
  %v45 = vunpack.c.l.b16 %v16
  %v46 = vunpack.c.h.b16 %v16
  %v47 = vunpack.c.l.b16 %v17
  %v48 = vunpack.c.h.b16 %v17
  %v49 = vunpack.c.l.b16 %v18
  %v50 = vunpack.c.h.b16 %v18
  %v51 = vunpack.c.l.b16 %v19
  %v52 = vunpack.c.h.b16 %v19
  %v53 = vpack.c.b16 %v47, %v45
  %v54 = vpack.c.b16 %v48, %v46
  %v55 = vpack.c.b16 %v51, %v49
  %v56 = vpack.c.b16 %v52, %v50
  %v79 = vunpack.c.l.b16 %v20
  %v80 = vunpack.c.l.b16 %v21
  %v81 = vunpack.c.l.b16 %v22
  %v82 = vunpack.c.l.b16 %v23
  %v83 = vunpack.c.l.b16 %v24
  %v84 = vunpack.c.l.b16 %v25
  %v85 = vunpack.c.l.b16 %v26
  %v86 = vunpack.c.l.b16 %v27
  %v87 = vunpack.c.l.b16 %v28
  %v88 = vunpack.c.l.b16 %v29
  %v89 = vunpack.c.l.b16 %v30
  %v90 = vunpack.c.l.b16 %v31
  %v91 = vunpack.c.l.b16 %v32
  %v92 = vunpack.c.l.b16 %v33
  %v93 = vunpack.c.l.b16 %v34
  %v94 = vunpack.c.l.b16 %v35
  %v95 = vunpack.c.l.b16 %v36
  %v96 = vunpack.c.l.b16 %v37
  %v97 = vunpack.c.l.b16 %v38
  %v98 = vunpack.c.l.b16 %v39
  %v99 = vpack.c.b16 %v80, %v79
  %v100 = vpack.c.b16 %v82, %v81
  %v101 = vpack.c.b16 %v84, %v83
  %v102 = vpack.c.b16 %v86, %v85
  %v103 = vpack.c.b16 %v88, %v87
  %v104 = vpack.c.b16 %v90, %v89
  %v105 = vpack.c.b16 %v92, %v91
  %v106 = vpack.c.b16 %v94, %v93
  %v107 = vpack.c.b16 %v96, %v95
  %v108 = vpack.c.b16 %v98, %v97
  %vm119 = vcmask 261120
  %v121 = vsel %vm119, %v54, 0
  %v124 = vsel %vm119, %v56, 0
  %126 = vmatpush.bf16.msra.mxu0 %v106
  %127 = vmatpush.bf16.msra.mxu0 %v105
  %128 = vmatpush.bf16.msra.mxu0 %v104
  %129 = vmatpush.bf16.msra.mxu0 %v103
  %130 = vmatpush.bf16.msra.mxu0 %v102
  %131 = vmatpush.bf16.msra.mxu0 %v101
  %132 = vmatpush.bf16.msra.mxu0 %v100
  %133 = vmatpush.bf16.msra.mxu0 %v99
  %134 = vmatmul.bf16.gmra.mxu0 %v53
  %v135 = vpop.f32.mrf.mxu0
  %v136 = vadd.f32 %v40, %v135
  %v137 = vpop.f32.mrf.mxu0
  %v138 = vadd.f32 %v40, %v137
  %139 = vmatmul.bf16.gmra.mxu0 %v55
  %v140 = vpop.f32.mrf.mxu0
  %v141 = vadd.f32 %v40, %v140
  %v142 = vpop.f32.mrf.mxu0
  %v143 = vadd.f32 %v40, %v142
  %144 = vdwg.mxu0
  %145 = vmatpush.bf16.msra.mxu0 0
  %146 = vmatpush.bf16.msra.mxu0 0
  %147 = vmatpush.bf16.msra.mxu0 0
  %148 = vmatpush.bf16.msra.mxu0 0
  %149 = vmatpush.bf16.msra.mxu0 0
  %150 = vmatpush.bf16.msra.mxu0 0
  %151 = vmatpush.bf16.msra.mxu0 %v108
  %152 = vmatpush.bf16.msra.mxu0 %v107
  %153 = vmatmul.bf16.gmra.mxu0 %v121
  %v154 = vpop.f32.mrf.mxu0
  %v155 = vadd.f32 %v136, %v154
  %v156 = vpop.f32.mrf.mxu0
  %v157 = vadd.f32 %v138, %v156
  %158 = vmatmul.bf16.gmra.mxu0 %v124
  %v159 = vpop.f32.mrf.mxu0
  %v160 = vadd.f32 %v141, %v159
  %v161 = vpop.f32.mrf.mxu0
  %v162 = vadd.f32 %v143, %v161
  %163 = vdwg.mxu0
  %v164 = vmax.f32 %v155, 0.0
  %v165 = vmax.f32 %v157, 0.0
  %v166 = vmax.f32 %v160, 0.0
  %v167 = vmax.f32 %v162, 0.0
  %v168 = vlaneseq
  %v169 = vshrl.u32 %v168, 7
  %v170 = vadd.s32 %v169, 8
  %v171 = vadd.s32 %v169, 16
  %v172 = vadd.s32 %v169, 24
  %vm173 = vcmp.lt.s32.totalorder %v169, 0
  %v174 = vsub.s32 0, %v169
  %v175 = vsel %vm173, %v174, %v169
  %v176 = vshrl.u32 %v175, 4
  %v177 = vand.u32 %v175, 15
  %v178 = vsub.s32 0, %v177
  %v179 = vsel %vm173, %v178, %v177
  %vm180 = vcmp.lt.s32.totalorder %v170, 0
  %v181 = vsub.s32 0, %v170
  %v182 = vsel %vm180, %v181, %v170
  %v183 = vshrl.u32 %v182, 4
  %v184 = vand.u32 %v182, 15
  %v185 = vsub.s32 0, %v184
  %v186 = vsel %vm180, %v185, %v184
  %vm187 = vcmp.lt.s32.totalorder %v171, 0
  %v188 = vsub.s32 0, %v171
  %v189 = vsel %vm187, %v188, %v171
  %v190 = vshrl.u32 %v189, 4
  %v191 = vand.u32 %v189, 15
  %v192 = vsub.s32 0, %v191
  %v193 = vsel %vm187, %v192, %v191
  %vm194 = vcmp.lt.s32.totalorder %v172, 0
  %v195 = vsub.s32 0, %v172
  %v196 = vsel %vm194, %v195, %v172
  %v197 = vshrl.u32 %v196, 4
  %v198 = vand.u32 %v196, 15
  %v199 = vsub.s32 0, %v198
  %v200 = vsel %vm194, %v199, %v198
  %vm201 = vcmp.ne.s32.totalorder %v179, 0
  %vm202 = vcmp.ne.s32.totalorder %v186, 0
  %vm203 = vcmp.ne.s32.totalorder %v193, 0
  %vm204 = vcmp.ne.s32.totalorder %v200, 0
  %vm205 = vcmp.lt.s32.totalorder %v179, 0
  %vm206 = vcmp.lt.s32.totalorder %v186, 0
  %vm207 = vcmp.lt.s32.totalorder %v193, 0
  %vm208 = vcmp.lt.s32.totalorder %v200, 0
  %vm209 = vmand %vm205, %vm201
  %vm210 = vmand %vm206, %vm202
  %vm211 = vmand %vm207, %vm203
  %vm212 = vmand %vm208, %vm204
  %v213 = vadd.s32 %v179, 16
  %v214 = vadd.s32 %v186, 16
  %v215 = vadd.s32 %v193, 16
  %v216 = vadd.s32 %v200, 16
  %v217 = vsel %vm209, %v213, %v179
  %v218 = vsel %vm210, %v214, %v186
  %v219 = vsel %vm211, %v215, %v193
  %v220 = vsel %vm212, %v216, %v200
  %v221 = vcvt.s32.f32 %v217
  %v222 = vcvt.s32.f32 %v218
  %v223 = vcvt.s32.f32 %v219
  %v224 = vcvt.s32.f32 %v220
  %v225 = vperm.slane %v15, 3
  %vm226 = vcmp.le.f32.partialorder %v221, %v225
  %vm227 = vcmp.le.f32.partialorder %v222, %v225
  %vm228 = vcmp.le.f32.partialorder %v223, %v225
  %vm229 = vcmp.le.f32.partialorder %v224, %v225
  %v230 = vsel %vm226, %v164, 0.0
  %v231 = vsel %vm227, %v165, 0.0
  %v232 = vsel %vm228, %v166, 0.0
  %v233 = vsel %vm229, %v167, 0.0
  %vm234 = vcmask 195584
  %v235 = vsel %vm234, %v230, -inf
  %v236 = vsel %vm234, %v231, -inf
  %v237 = vmax.f32 %v235, %v236
  %v238 = vrot.slane %v237, 4
  %v239 = vmax.f32 %v237, %v238
  %v240 = vrot.slane %v239, 2
  %v241 = vmax.f32 %v239, %v240
  %v242 = vrot.slane %v241, 1
  %v243 = vmax.f32 %v241, %v242
  %v244 = vsel %vm234, %v232, -inf
  %v245 = vsel %vm234, %v233, -inf
  %v246 = vmax.f32 %v244, %v245
  %v247 = vrot.slane %v246, 4
  %v248 = vmax.f32 %v246, %v247
  %v249 = vrot.slane %v248, 2
  %v250 = vmax.f32 %v248, %v249
  %v251 = vrot.slane %v250, 1
  %v252 = vmax.f32 %v250, %v251
  %v253 = vperm.slane %v15, 1
  %v254 = vmul.f32 %v243, %v253
  %v255 = vmul.f32 %v252, %v253
  %v258 = vrot.slane %v255, 7
  %vm259 = vcmask 1041409
  %v260 = vsel %vm259, %v258, %v254
  %vm262 = vcmask 189440
  %v263 = vsel %vm262, %v260, 0.0
  %264 = vadd.xlane.f32.xlu0 %v263
  %v265 = vpop.xlane.xlu0 %264
  %v266 = vperm.slane %v15, 2
  %v267 = vadd.f32 %v265, %v266
  %vm268 = vcmask 1024
  %269 = vst.msk [vmem:[%s3] sm:$0x3] %vm268, %v267
  // Predicated region
  $region14: #{cnn_tag_forward.1} parent=0 // pred_check
    _
  $region15: #{cnn_tag_forward.1} parent=0 // pred_check_branch
    %271 = sbr.rel (0) target = $region17
  $region16: #{cnn_tag_forward.1} parent=0 // pred_region
    _
  $region17: #{cnn_tag_forward.1} parent=0 // pred_fallthru
    _
  // Predicated region
  $region18: #{cnn_tag_forward.1} parent=0 // pred_check
    _
  $region19: #{cnn_tag_forward.1} parent=0 // pred_check_branch
    %273 = sbr.rel (0) target = $region21
  $region20: #{cnn_tag_forward.1} parent=0 // pred_region
    _
  $region21: #{cnn_tag_forward.1} parent=0 // pred_fallthru
    _

</llo_original>
